<compile_context>
chip_gen: v7x
topology: tpu7x:2x2x1
jax: 0.10.0
libtpu: 0.0.40
codegen_flags: <defaults>
</compile_context>

<pallas_src>
import jax
import jax.numpy as jnp
from jax.experimental import pallas as pl
from jax.experimental.pallas import tpu as pltpu


def _vmem_limit_bytes():
    # Per-generation scoped-VMEM budget: ~half of physical VMEM, capped at 64 MiB.
    cap = 64 * 1024 * 1024  # conservative fallback (v7x-sized)
    try:
        info = pltpu.get_tpu_info()
        cap = int(getattr(info, "vmem_capacity_bytes", cap))
    except Exception:
        pass
    return max(32 * 1024 * 1024, min(64 * 1024 * 1024, cap // 2))


VMEM_LIMIT = _vmem_limit_bytes()
YB_RESIDENT_MAX_BYTES = 4 * 1024 * 1024  # keep resident yb modest on v7x's 64 MiB


def _round_up(x, m):
    return (x + m - 1) // m * m


def _pad2(x, rows, cols):
    r, c = x.shape
    return jnp.pad(x, ((0, rows - r), (0, cols - c)))


def _tiles_for(n):
    """Return (padded_n, row_tile, k_tile).

    * npad is a multiple of 128 (>= 256): lane-dense adj blocks / unmasked vst,
      and always >= 2 row tiles so both v7x TensorCores get work.
    * Tiles are the largest 128-multiples (<= 512 rows, <= 1024 k) dividing npad,
      amortizing the ~0.35us/step overhead while keeping the double-buffered
      working set a few MiB (well under the v7x 64 MiB VMEM).
    """
    npad = _round_up(max(n, 256), 128)
    tm = next(t for t in (512, 256, 128) if npad % t == 0 and npad >= 2 * t)
    tk = next(t for t in (1024, 512, 256, 128) if npad % t == 0)
    return npad, tm, tk


# ----------------------------- Pallas kernels ------------------------------

def mlp_kernel(x_ref, w1_ref, b1_ref, w2_ref, b2_ref, y_ref):
    # y = relu(x @ w1 + b1) @ w2 + b2
    # bf16 MXU operands, f32 accumulation; bias add / ReLU in f32.
    x = x_ref[...].astype(jnp.bfloat16)
    h = jnp.maximum(
        jnp.dot(x, w1_ref[...], preferred_element_type=jnp.float32)
        + b1_ref[...], 0.0)
    y = (jnp.dot(h.astype(jnp.bfloat16), w2_ref[...],
                 preferred_element_type=jnp.float32) + b2_ref[...])
    y_ref[...] = y.astype(y_ref.dtype)


def dual_mlp_kernel(x_ref, w1cat_ref, b1cat_ref, w2a_ref, b2a_ref,
                    w2b_ref, b2b_ref, ya_ref, yb_ref):
    # Two MLPs sharing the same input: x DMA'd once, first layer fused as
    # x @ [W1a | W1b] (doubles the matmul N-dim -> better MXU occupancy).
    x = x_ref[...].astype(jnp.bfloat16)
    h = jnp.maximum(
        jnp.dot(x, w1cat_ref[...], preferred_element_type=jnp.float32)
        + b1cat_ref[...], 0.0)
    dh = w2a_ref.shape[0]                       # padded hidden width (mult of 128)
    hb = h.astype(jnp.bfloat16)
    ya = (jnp.dot(hb[:, :dh], w2a_ref[...],
                  preferred_element_type=jnp.float32) + b2a_ref[...])
    yb = (jnp.dot(hb[:, dh:], w2b_ref[...],
                  preferred_element_type=jnp.float32) + b2b_ref[...])
    ya_ref[...] = ya.astype(ya_ref.dtype)       # f32 (added directly)
    yb_ref[...] = yb.astype(yb_ref.dtype)       # bf16 (fed to adj matmul)


def _make_spmm_kernel(tk, yb_resident):
    # out[i] = ya[i] + sum_k adj[i,k] @ yb[k]
    # Accumulates directly into the f32 output block (constant across k):
    # init with ya at k==0, so the last step is a plain accumulate (no scratch,
    # no finalize copy).  yb is either the k-keyed tile or a VMEM-resident full
    # array sliced with pl.ds.
    def kernel(adj_ref, yb_ref, ya_ref, out_ref):
        k = pl.program_id(1)

        @pl.when(k == 0)
        def _():
            out_ref[...] = ya_ref[...]

        if yb_resident:
            start = pl.multiple_of(k * tk, tk)
            yb = yb_ref[pl.ds(start, tk), :]
        else:
            yb = yb_ref[...]
        out_ref[...] += jnp.dot(adj_ref[...], yb,
                                preferred_element_type=jnp.float32)
        # TODO(synk): padded output rows carry MLP-bias "garbage"; harmless here
        # (zero adj padding + final slice) but zero them if downstream ops ever
        # read padded rows.
    return kernel


# ------------------------------ call wrappers -------------------------------

def mlp_call(x, params, tm, out_dtype=jnp.float32):
    w1, b1, w2, b2 = params
    n, din = x.shape
    dout = w2.shape[1]
    grid = (n // tm,)
    return pl.pallas_call(
        mlp_kernel,
        out_shape=jax.ShapeDtypeStruct((n, dout), out_dtype),
        grid=grid,
        in_specs=[
            pl.BlockSpec((tm, din), lambda i: (i, 0)),
            pl.BlockSpec(w1.shape, lambda i: (0, 0)),   # VMEM-resident weights
            pl.BlockSpec(b1.shape, lambda i: (0, 0)),
            pl.BlockSpec(w2.shape, lambda i: (0, 0)),
            pl.BlockSpec(b2.shape, lambda i: (0, 0)),
        ],
        out_specs=pl.BlockSpec((tm, dout), lambda i: (i, 0)),
        compiler_params=pltpu.CompilerParams(
            dimension_semantics=("parallel",),
            vmem_limit_bytes=VMEM_LIMIT),
    )(x, w1, b1, w2, b2)


def dual_mlp_call(x, params_a, params_b, tm):
    w1a, b1a, w2a, b2a = params_a
    w1b, b1b, w2b, b2b = params_b
    w1cat = jnp.concatenate([w1a, w1b], axis=1)
    b1cat = jnp.concatenate([b1a, b1b], axis=1)
    n, din = x.shape
    dout = w2a.shape[1]
    grid = (n // tm,)
    ya, yb = pl.pallas_call(
        dual_mlp_kernel,
        out_shape=(jax.ShapeDtypeStruct((n, dout), jnp.float32),
                   jax.ShapeDtypeStruct((n, dout), jnp.bfloat16)),
        grid=grid,
        in_specs=[
            pl.BlockSpec((tm, din), lambda i: (i, 0)),
            pl.BlockSpec(w1cat.shape, lambda i: (0, 0)),
            pl.BlockSpec(b1cat.shape, lambda i: (0, 0)),
            pl.BlockSpec(w2a.shape, lambda i: (0, 0)),
            pl.BlockSpec(b2a.shape, lambda i: (0, 0)),
            pl.BlockSpec(w2b.shape, lambda i: (0, 0)),
            pl.BlockSpec(b2b.shape, lambda i: (0, 0)),
        ],
        out_specs=(pl.BlockSpec((tm, dout), lambda i: (i, 0)),
                   pl.BlockSpec((tm, dout), lambda i: (i, 0))),
        compiler_params=pltpu.CompilerParams(
            dimension_semantics=("parallel",),
            vmem_limit_bytes=VMEM_LIMIT),
    )(x, w1cat, b1cat, w2a, b2a, w2b, b2b)
    return ya, yb


def spmm_add_call(adj_bf16, yb_bf16, ya_f32, tm, tk):
    # out = ya + adj @ yb   (bf16 MXU inputs, f32 accumulation into out block)
    npad = adj_bf16.shape[0]
    dout = ya_f32.shape[1]
    grid = (npad // tm, npad // tk)

    yb_resident = (npad * dout * 2) <= YB_RESIDENT_MAX_BYTES
    if yb_resident:
        # full-array, constant index map -> DMA'd once, stays VMEM-resident
        yb_spec = pl.BlockSpec((npad, dout), lambda i, k: (0, 0))
    else:
        yb_spec = pl.BlockSpec((tk, dout), lambda i, k: (k, 0))

    flops = 2 * npad * npad * dout
    bytes_accessed = (npad * npad * 2) + (npad * dout * 2) + 2 * (npad * dout * 4)
    return pl.pallas_call(
        _make_spmm_kernel(tk, yb_resident),
        out_shape=jax.ShapeDtypeStruct((npad, dout), jnp.float32),
        grid=grid,
        in_specs=[
            pl.BlockSpec((tm, tk), lambda i, k: (i, k)),      # adj tile
            yb_spec,                                          # yb (resident or k-keyed)
            pl.BlockSpec((tm, dout), lambda i, k: (i, 0)),    # ya keyed on i only
        ],
        out_specs=pl.BlockSpec((tm, dout), lambda i, k: (i, 0)),
        compiler_params=pltpu.CompilerParams(
            dimension_semantics=("parallel", "arbitrary"),
            vmem_limit_bytes=VMEM_LIMIT),
        cost_estimate=pl.CostEstimate(flops=flops, transcendentals=0,
                                      bytes_accessed=bytes_accessed),
    )(adj_bf16, yb_bf16, ya_f32)


# --------------------------- parameter init / module ------------------------

def init_mlp_params(key, in_dim, hid_dim, out_dim):
    """PyTorch-Linear-style uniform init U(-1/sqrt(fan_in), 1/sqrt(fan_in))."""
    k1, k2, k3, k4 = jax.random.split(key, 4)
    lim1 = 1.0 / (in_dim ** 0.5)
    lim2 = 1.0 / (hid_dim ** 0.5)
    w1 = jax.random.uniform(k1, (in_dim, hid_dim), jnp.float32, -lim1, lim1)
    b1 = jax.random.uniform(k2, (1, hid_dim), jnp.float32, -lim1, lim1)
    w2 = jax.random.uniform(k3, (hid_dim, out_dim), jnp.float32, -lim2, lim2)
    b2 = jax.random.uniform(k4, (1, out_dim), jnp.float32, -lim2, lim2)
    return (w1, b1, w2, b2)


def _pad_params(params, din_p, dout_p):
    """Pad to lane-dense 128 multiples; weights -> bf16 (MXU), biases stay f32."""
    w1, b1, w2, b2 = params
    return (_pad2(w1, din_p, dout_p).astype(jnp.bfloat16),
            _pad2(b1, 1, dout_p),
            _pad2(w2, dout_p, dout_p).astype(jnp.bfloat16),
            _pad2(b2, 1, dout_p))


class MessagePassingPallas:
    """Mirrors MessagePassing.forward from layers.py (eval mode, dense adj)."""

    def __init__(self, input_dim, output_dim, dropout, radius, key):
        self.input_dim = input_dim
        self.output_dim = output_dim
        self.radius = radius
        self.din_p = _round_up(input_dim, 128)     # lane-dense padded dims
        self.dout_p = _round_up(output_dim, 128)

        n_fc1 = radius + 2
        n_fc2 = 3 * radius - 2
        keys = jax.random.split(key, n_fc1 + n_fc2)
        self.fc1_raw = [init_mlp_params(keys[i], input_dim, output_dim, output_dim)
                        for i in range(n_fc1)]
        self.fc2_raw = [init_mlp_params(keys[n_fc1 + i], output_dim, output_dim, output_dim)
                        for i in range(n_fc2)]
        self.fc1 = [_pad_params(p, self.din_p, self.dout_p) for p in self.fc1_raw]
        self.fc2 = [_pad_params(p, self.dout_p, self.dout_p) for p in self.fc2_raw]
        # TODO(synk): dropout is eval-mode identity (no RNG dropout in kernel).
        # TODO(synk): for tiny graphs all 2r hops could be fused into one
        # pallas_call (hop grid axis + PrefetchScalarGridSpec weight selection)
        # to cut launch overhead; kept as separate calls here for clarity.
        # TODO(synk): ya-MLP could be fused into the spmm finalize to drop one
        # pallas_call + the ya HBM roundtrip per hop.

    def prepare_adj(self, adj, n_nodes):
        """Pad + cast adjacency matrices to bf16 once, outside the forward path."""
        npad, _, _ = _tiles_for(n_nodes)
        out = []
        for a in adj:
            if a.shape == (1, 1):
                out.append(a)                  # trivial marker, never fed to spmm
            else:
                out.append(_pad2(a, npad, npad).astype(jnp.bfloat16))
        return out

    def __call__(self, adj, features):
        r = self.radius
        n = features[0].shape[0]
        npad, tm, tk = _tiles_for(n)

        # node features: pad rows -> npad, feature dim -> din_p, cast bf16 once
        l = [_pad2(features[i], npad, self.din_p).astype(jnp.bfloat16)
             for i in range(r + 1)]

        def get_adj(i):
            a = adj[i]
            if a.shape == (npad, npad) and a.dtype == jnp.bfloat16:
                return a                                      # pre-prepared
            return _pad2(a, npad, npad).astype(jnp.bfloat16)  # fallback

        x = None
        for i in range(2 * r - 1, -1, -1):
            if i == 2 * r - 1:
                if adj[i].shape != (1, 1):
                    ya, yb = dual_mlp_call(l[i // 2 + 1],
                                           self.fc1[(i + 1) // 2],
                                           self.fc1[(i + 1) // 2 + 1], tm)
                    x = spmm_add_call(get_adj(i), yb, ya, tm, tk)
                else:
                    x = mlp_call(l[i // 2 + 1], self.fc1[(i + 1) // 2], tm)
            elif i % 2 == 0:
                ya = mlp_call(l[i // 2], self.fc1[i // 2], tm)
                yb = mlp_call(x, self.fc2[i + i // 2], tm, out_dtype=jnp.bfloat16)
                x = spmm_add_call(get_adj(i), yb, ya, tm, tk)
            elif adj[i].shape != (1, 1):
                ya, yb = dual_mlp_call(x,
                                       self.fc2[i + (i - 1) // 2],
                                       self.fc2[i + (i - 1) // 2 + 1], tm)
                x = spmm_add_call(get_adj(i), yb, ya, tm, tk)
            # x = dropout(x)  -> identity in eval mode
        return x[:n, :self.output_dim]


# ------------------------------ pure-JAX reference ---------------------------

def reference_forward(model, adj, features):
    """Matches the torch forward structure with the kernel's numerics
    (bf16 MXU operands, f32 accumulation).  NOTE: the torch module itself runs
    f32 matmuls; bf16 operands are a deliberate TPU choice shared by kernel and
    reference."""

    def mlp(x, p):
        w1, b1, w2, b2 = p
        xb = x.astype(jnp.bfloat16)
        h = jnp.maximum(
            jnp.dot(xb, w1.astype(jnp.bfloat16),
                    preferred_element_type=jnp.float32) + b1, 0.0)
        return (jnp.dot(h.astype(jnp.bfloat16), w2.astype(jnp.bfloat16),
                        preferred_element_type=jnp.float32) + b2)

    def spmm(a, y):
        return jnp.dot(a.astype(jnp.bfloat16), y.astype(jnp.bfloat16),
                       preferred_element_type=jnp.float32)

    r = model.radius
    l = [features[i] for i in range(r + 1)]
    x = None
    for i in range(2 * r - 1, -1, -1):
        if i == 2 * r - 1:
            if adj[i].shape != (1, 1):
                x = (mlp(l[i // 2 + 1], model.fc1_raw[(i + 1) // 2])
                     + spmm(adj[i], mlp(l[i // 2 + 1], model.fc1_raw[(i + 1) // 2 + 1])))
            else:
                x = mlp(l[i // 2 + 1], model.fc1_raw[(i + 1) // 2])
        elif i % 2 == 0:
            x = (mlp(l[i // 2], model.fc1_raw[i // 2])
                 + spmm(adj[i], mlp(x, model.fc2_raw[i + i // 2])))
        elif adj[i].shape != (1, 1):
            x = (mlp(x, model.fc2_raw[i + (i - 1) // 2])
                 + spmm(adj[i], mlp(x, model.fc2_raw[i + (i - 1) // 2 + 1])))
    return x


# ----------------------------------- main ------------------------------------

if __name__ == "__main__":
    key = jax.random.PRNGKey(0)
    k_mod, k_feat, k_adj = jax.random.split(key, 3)

    input_dim, output_dim, radius = 16, 32, 2
    n_nodes = 8

    model = MessagePassingPallas(input_dim, output_dim, dropout=0.0,
                                 radius=radius, key=k_mod)

    # features: list of (radius + 1) node-feature matrices, each (n_nodes, input_dim)
    feat_keys = jax.random.split(k_feat, radius + 1)
    features = [jax.random.normal(feat_keys[i], (n_nodes, input_dim), jnp.float32)
                for i in range(radius + 1)]

    # adj: list of 2*radius dense adjacency matrices, each (n_nodes, n_nodes)
    adj_keys = jax.random.split(k_adj, 2 * radius)
    adj = [jnp.abs(jax.random.normal(adj_keys[i], (n_nodes, n_nodes), jnp.float32))
           for i in range(2 * radius)]

    # pad + cast adjacency to bf16 ONCE, outside the forward path
    adj_prepared = model.prepare_adj(adj, n_nodes)

    out = model(adj_prepared, features)
    out = jax.block_until_ready(out)
    assert out.shape == (n_nodes, output_dim), out.shape

    ref = jax.block_until_ready(reference_forward(model, adj, features))
    max_rel_err = float(jnp.max(jnp.abs(out - ref) / (jnp.abs(ref) + 1.0)))
    assert max_rel_err < 5e-2, f"max rel err {max_rel_err}"

    print("KERNEL_OK")
</pallas_src>

<mosaic_0001>
module attributes {stable_mosaic.version = 11 : i64} {
  func.func @dual_mlp_kernel(%arg0: i32, %arg1: memref<128x128xbf16, #tpu.memory_space<vmem>>, %arg2: memref<128x256xbf16, #tpu.memory_space<vmem>>, %arg3: memref<1x256xf32, #tpu.memory_space<vmem>>, %arg4: memref<128x128xbf16, #tpu.memory_space<vmem>>, %arg5: memref<1x128xf32, #tpu.memory_space<vmem>>, %arg6: memref<128x128xbf16, #tpu.memory_space<vmem>>, %arg7: memref<1x128xf32, #tpu.memory_space<vmem>>, %arg8: memref<128x128xf32, #tpu.memory_space<vmem>>, %arg9: memref<128x128xbf16, #tpu.memory_space<vmem>>) attributes {dimension_semantics = [#tpu.dimension_semantics<parallel>], iteration_bounds = array<i64: 2>, scalar_prefetch = 0 : i64, scratch_operands = 0 : i64, tpu.core_type = #tpu.core_type<tc>, window_params = [{transform_indices = @transform_0, window_bounds = array<i64: 128, 128>}, {pipeline_mode = #tpu.pipeline_mode<synchronous>, transform_indices = @transform_1, window_bounds = array<i64: 128, 256>}, {pipeline_mode = #tpu.pipeline_mode<synchronous>, transform_indices = @transform_2, window_bounds = array<i64: 1, 256>}, {pipeline_mode = #tpu.pipeline_mode<synchronous>, transform_indices = @transform_3, window_bounds = array<i64: 128, 128>}, {pipeline_mode = #tpu.pipeline_mode<synchronous>, transform_indices = @transform_4, window_bounds = array<i64: 1, 128>}, {pipeline_mode = #tpu.pipeline_mode<synchronous>, transform_indices = @transform_5, window_bounds = array<i64: 128, 128>}, {pipeline_mode = #tpu.pipeline_mode<synchronous>, transform_indices = @transform_6, window_bounds = array<i64: 1, 128>}, {transform_indices = @transform_7, window_bounds = array<i64: 128, 128>}, {transform_indices = @transform_8, window_bounds = array<i64: 128, 128>}]} {
    %c0 = arith.constant 0 : index
    %c0_0 = arith.constant 0 : index
    %0 = vector.load %arg1[%c0, %c0_0] : memref<128x128xbf16, #tpu.memory_space<vmem>>, vector<128x128xbf16>
    %c0_1 = arith.constant 0 : index
    %c0_2 = arith.constant 0 : index
    %1 = vector.load %arg2[%c0_1, %c0_2] : memref<128x256xbf16, #tpu.memory_space<vmem>>, vector<128x256xbf16>
    %cst = arith.constant dense<0.000000e+00> : vector<128x256xf32>
    %2 = tpu.matmul %0, %1, %cst {dimension_numbers = #tpu.dot_dimension_numbers<[1], [0], [0], [1], [0, 0, 1, 1], [], []>} : vector<128x128xbf16>, vector<128x256xbf16>, vector<128x256xf32> -> vector<128x256xf32>
    %c0_3 = arith.constant 0 : index
    %c0_4 = arith.constant 0 : index
    %3 = vector.load %arg3[%c0_3, %c0_4] : memref<1x256xf32, #tpu.memory_space<vmem>>, vector<1x256xf32>
    %4 = vector.broadcast %3 : vector<1x256xf32> to vector<128x256xf32>
    %5 = arith.addf %2, %4 : vector<128x256xf32>
    %cst_5 = arith.constant 0.000000e+00 : f32
    %6 = vector.broadcast %cst_5 : f32 to vector<128x256xf32>
    %7 = arith.maximumf %5, %6 : vector<128x256xf32>
    %8 = arith.truncf %7 : vector<128x256xf32> to vector<128x256xbf16>
    %9 = vector.extract_strided_slice %8 {offsets = [0, 0], sizes = [128, 128], strides = [1, 1]} : vector<128x256xbf16> to vector<128x128xbf16>
    %c0_6 = arith.constant 0 : index
    %c0_7 = arith.constant 0 : index
    %10 = vector.load %arg4[%c0_6, %c0_7] : memref<128x128xbf16, #tpu.memory_space<vmem>>, vector<128x128xbf16>
    %cst_8 = arith.constant dense<0.000000e+00> : vector<128x128xf32>
    %11 = tpu.matmul %9, %10, %cst_8 {dimension_numbers = #tpu.dot_dimension_numbers<[1], [0], [0], [1], [0, 0, 1, 1], [], []>} : vector<128x128xbf16>, vector<128x128xbf16>, vector<128x128xf32> -> vector<128x128xf32>
    %c0_9 = arith.constant 0 : index
    %c0_10 = arith.constant 0 : index
    %12 = vector.load %arg5[%c0_9, %c0_10] : memref<1x128xf32, #tpu.memory_space<vmem>>, vector<1x128xf32>
    %13 = vector.broadcast %12 : vector<1x128xf32> to vector<128x128xf32>
    %14 = arith.addf %11, %13 : vector<128x128xf32>
    %15 = vector.extract_strided_slice %8 {offsets = [0, 128], sizes = [128, 128], strides = [1, 1]} : vector<128x256xbf16> to vector<128x128xbf16>
    %c0_11 = arith.constant 0 : index
    %c0_12 = arith.constant 0 : index
    %16 = vector.load %arg6[%c0_11, %c0_12] : memref<128x128xbf16, #tpu.memory_space<vmem>>, vector<128x128xbf16>
    %cst_13 = arith.constant dense<0.000000e+00> : vector<128x128xf32>
    %17 = tpu.matmul %15, %16, %cst_13 {dimension_numbers = #tpu.dot_dimension_numbers<[1], [0], [0], [1], [0, 0, 1, 1], [], []>} : vector<128x128xbf16>, vector<128x128xbf16>, vector<128x128xf32> -> vector<128x128xf32>
    %c0_14 = arith.constant 0 : index
    %c0_15 = arith.constant 0 : index
    %18 = vector.load %arg7[%c0_14, %c0_15] : memref<1x128xf32, #tpu.memory_space<vmem>>, vector<1x128xf32>
    %19 = vector.broadcast %18 : vector<1x128xf32> to vector<128x128xf32>
    %20 = arith.addf %17, %19 : vector<128x128xf32>
    %c0_16 = arith.constant 0 : index
    %c0_17 = arith.constant 0 : index
    %21 = vector.load %arg8[%c0_16, %c0_17] : memref<128x128xf32, #tpu.memory_space<vmem>>, vector<128x128xf32>
    tpu.vector_store %arg8[%c0_16, %c0_17], %14 {strides = array<i32>} : memref<128x128xf32, #tpu.memory_space<vmem>>, vector<128x128xf32>,
    %22 = arith.truncf %20 : vector<128x128xf32> to vector<128x128xbf16>
    %c0_18 = arith.constant 0 : index
    %c0_19 = arith.constant 0 : index
    %23 = vector.load %arg9[%c0_18, %c0_19] : memref<128x128xbf16, #tpu.memory_space<vmem>>, vector<128x128xbf16>
    tpu.vector_store %arg9[%c0_18, %c0_19], %22 {strides = array<i32>} : memref<128x128xbf16, #tpu.memory_space<vmem>>, vector<128x128xbf16>,
    return
  }
  func.func @transform_0(%arg0: i32) -> (i32, i32) {
    %c0_i32 = arith.constant 0 : i32
    %c0_i32_0 = arith.constant 0 : i32
    return %arg0, %c0_i32 : i32, i32
  }
  func.func @transform_1(%arg0: i32) -> (i32, i32) {
    %c0_i32 = arith.constant 0 : i32
    %c0_i32_0 = arith.constant 0 : i32
    %c0_i32_1 = arith.constant 0 : i32
    return %c0_i32, %c0_i32_0 : i32, i32
  }
  func.func @transform_2(%arg0: i32) -> (i32, i32) {
    %c0_i32 = arith.constant 0 : i32
    %c0_i32_0 = arith.constant 0 : i32
    %c0_i32_1 = arith.constant 0 : i32
    return %c0_i32, %c0_i32_0 : i32, i32
  }
  func.func @transform_3(%arg0: i32) -> (i32, i32) {
    %c0_i32 = arith.constant 0 : i32
    %c0_i32_0 = arith.constant 0 : i32
    %c0_i32_1 = arith.constant 0 : i32
    return %c0_i32, %c0_i32_0 : i32, i32
  }
  func.func @transform_4(%arg0: i32) -> (i32, i32) {
    %c0_i32 = arith.constant 0 : i32
    %c0_i32_0 = arith.constant 0 : i32
    %c0_i32_1 = arith.constant 0 : i32
    return %c0_i32, %c0_i32_0 : i32, i32
  }
  func.func @transform_5(%arg0: i32) -> (i32, i32) {
    %c0_i32 = arith.constant 0 : i32
    %c0_i32_0 = arith.constant 0 : i32
    %c0_i32_1 = arith.constant 0 : i32
    return %c0_i32, %c0_i32_0 : i32, i32
  }
  func.func @transform_6(%arg0: i32) -> (i32, i32) {
    %c0_i32 = arith.constant 0 : i32
    %c0_i32_0 = arith.constant 0 : i32
    %c0_i32_1 = arith.constant 0 : i32
    return %c0_i32, %c0_i32_0 : i32, i32
  }
  func.func @transform_7(%arg0: i32) -> (i32, i32) {
    %c0_i32 = arith.constant 0 : i32
    %c0_i32_0 = arith.constant 0 : i32
    return %arg0, %c0_i32 : i32, i32
  }
  func.func @transform_8(%arg0: i32) -> (i32, i32) {
    %c0_i32 = arith.constant 0 : i32
    %c0_i32_0 = arith.constant 0 : i32
    return %arg0, %c0_i32 : i32, i32
  }
}

</mosaic_0001>

<llo_original>
// kernel: tpu_custom_call.1
$region0: #{tpu_custom_call.1}
  #allocation0 [shape = 'u32[]', space=smem, size = 0x4, offset = 0x4, fixed_abs, tag = 'smem constant byte address 0x4 - core index']
  #allocation1 [shape = 'u32[144,128]{1,0:T(1,128)}', space=vmem, size = 0x12000, scoped, tag = 'internal scratch']
  %s0 = inlined_call_operand.hbm [shape: bf16[256,128], index: 0, kind: input, shape index: {}]
  %s1 = inlined_call_operand.hbm [shape: bf16[128,256], index: 1, kind: input, shape index: {}]
  %s2 = inlined_call_operand.vmem [shape: f32[1,256], index: 2, kind: input, shape index: {}]
  %s3 = inlined_call_operand.hbm [shape: bf16[128,128], index: 3, kind: input, shape index: {}]
  %s4 = inlined_call_operand.vmem [shape: f32[1,128], index: 4, kind: input, shape index: {}]
  %s5 = inlined_call_operand.hbm [shape: bf16[128,128], index: 5, kind: input, shape index: {}]
  %s6 = inlined_call_operand.vmem [shape: f32[1,128], index: 6, kind: input, shape index: {}]
  %s7 = inlined_call_operand.hbm [shape: f32[256,128], index: 7, kind: output, shape index: {0}]
  %s8 = inlined_call_operand.hbm [shape: bf16[256,128], index: 8, kind: output, shape index: {1}]
  %9 = xla_tuple %s7, %s8
  %s10 = sld [smem:[#allocation0]]
  $region85: #{tpu_custom_call.1} parent=0
    _
  %s12 = ssub.s32 1, %s10
  %s13 = scalar_select 0, %s12, %s10
  $region1: #{tpu_custom_call.1} parent=0
    #allocation2 [shape = 'u8[65536]{0}', space=vmem, size = 0x10000, scoped, tag = 'input window, operand 0']
    #allocation3 [shape = 's32[2]{0}', space=sflag, size = 0x8, scoped, tag = 'scoped memory for tpu_custom_call.1']
    #allocation4 [shape = 's32[2]{0}', space=sflag, size = 0x8, scoped, tag = 'scoped memory for tpu_custom_call.1']
    #allocation5 [shape = 'u8[65536]{0}', space=vmem, size = 0x10000, scoped, tag = 'input window, operand 1, single buffered']
    #allocation6 [shape = 's32[1]{0}', space=sflag, size = 0x4, scoped, tag = 'scoped memory for tpu_custom_call.1']
    #allocation7 [shape = 'u8[32768]{0}', space=vmem, size = 0x8000, scoped, tag = 'input window, operand 3, single buffered']
    #allocation8 [shape = 'u8[32768]{0}', space=vmem, size = 0x8000, scoped, tag = 'input window, operand 5, single buffered']
    #allocation9 [shape = 's32[1]{0}', space=sflag, size = 0x4, scoped, tag = 'scoped memory for tpu_custom_call.1']
    #allocation10 [shape = 'u8[131072]{0}', space=vmem, size = 0x20000, scoped, tag = 'output window, operand 0']
    #allocation11 [shape = 'u8[65536]{0}', space=vmem, size = 0x10000, scoped, tag = 'output window, operand 1']
    #allocation12 [shape = 's32[2]{0}', space=sflag, size = 0x8, scoped, tag = 'scoped memory for tpu_custom_call.1']
    %14 = vsyncpa [#allocation3], 0
    %s15 = scalar_lea.sflag [#allocation3], 1
    %16 = vsyncpa %s15, 0
    %17 = vsyncpa [#allocation6], 0
    %18 = vsyncpa [#allocation9], 0
    %19 = vsyncpa [#allocation4], 0
    %s20 = scalar_lea.sflag [#allocation4], 1
    %21 = vsyncpa %s20, 0
    %22 = vsyncpa [#allocation12], 0
    %s23 = scalar_lea.sflag [#allocation12], 1
    %24 = vsyncpa %s23, 0
    loop: start=0, step=1, limit=4
    $region2: #{tpu_custom_call.1} parent=1 // loop_pre_header
      _
    $region3: #{tpu_custom_call.1} parent=1 // loop_header
      %s26 = sphi 0, %s30
      %p27 = scmp.ge.s32.totalorder %s26, 4
      %s36 = sphi 0, %s38
      %s39 = sphi 0, %s36
      %s40 = sphi 0, %s39
      %s56 = sphi 0, %s40
      %s60 = sphi 0, %s60
      %s62 = sphi 0, %s60
      %s63 = sphi 0, %s62
      %s77 = sphi 0, %s63
      %s81 = sphi 0, %s81
      %s83 = sphi 0, %s81
      %s84 = sphi 0, %s83
      %s98 = sphi 0, %s84
      %s102 = sphi 0, %s102
      %s104 = sphi 0, %s102
      %s105 = sphi 0, %s104
      %s119 = sphi 0, %s105
      %s123 = sphi 0, %s123
      %s125 = sphi 0, %s123
      %s126 = sphi 0, %s125
      %s140 = sphi 0, %s126
      %s144 = sphi 0, %s144
      %s146 = sphi 0, %s144
      %s147 = sphi 0, %s146
      %s161 = sphi 0, %s147
      %s165 = sphi 0, %s165
      %s167 = sphi 0, %s165
      %s168 = sphi 0, %s167
      %s182 = sphi 0, %s168
      %s188 = sphi 0, %s190
      %s191 = sphi 0, %s188
      %s192 = sphi 0, %s191
      %s208 = sphi 0, %s192
      %s214 = sphi 0, %s216
      %s217 = sphi 0, %s214
      %s218 = sphi 0, %s217
      %s234 = sphi 0, %s218
    $region4: #{tpu_custom_call.1} parent=1 // loop_header_branch
      %29 = sbr.rel (%p27) target = $region8
    $region5: #{tpu_custom_call.1} parent=1 // loop_body
      %s31 = ssub.s32 %s26, 1
      %s32 = ssub.s32 %s26, 2
      %s33 = sadd.s32 %s26, 1
      %s34 = ssub.s32 %s26, %s33
      %p35 = scmp.eq.s32.totalorder %s34, 0
      %s37 = sadd.s32 %s36, 1
      %s38 = scalar_select %p35, %s36, %s37
      %p41 = pneg %p35
      %p42 = scmp.eq.s32.totalorder %s26, 1
      %p43 = por %p41, %p42
      %p44 = scmp.ne.s32.totalorder %s36, %s39
      %p45 = scmp.eq.s32.totalorder %s26, 0
      %p46 = por %p44, %p45
      %p47 = scmp.ne.s32.totalorder %s36, %s39
      %p48 = scmp.eq.s32.totalorder %s31, 1
      %p49 = por %p47, %p48
      %p50 = scmp.ne.s32.totalorder %s39, %s40
      %p51 = scmp.eq.s32.totalorder %s31, 0
      %p52 = por %p50, %p51
      %p53 = scmp.ne.s32.totalorder %s39, %s40
      %p54 = scmp.eq.s32.totalorder %s32, 1
      %p55 = por %p53, %p54
      %p57 = scmp.ne.s32.totalorder %s40, %s56
      %p58 = scmp.eq.s32.totalorder %s32, 0
      %p59 = por %p57, %p58
      %s61 = sadd.s32 %s60, 1
      %p64 = scmp.eq.s32.totalorder %s26, 1
      %p65 = scmp.ne.s32.totalorder %s60, %s62
      %p66 = scmp.eq.s32.totalorder %s26, 0
      %p67 = por %p65, %p66
      %p68 = scmp.ne.s32.totalorder %s60, %s62
      %p69 = scmp.eq.s32.totalorder %s31, 1
      %p70 = por %p68, %p69
      %p71 = scmp.ne.s32.totalorder %s62, %s63
      %p72 = scmp.eq.s32.totalorder %s31, 0
      %p73 = por %p71, %p72
      %p74 = scmp.ne.s32.totalorder %s62, %s63
      %p75 = scmp.eq.s32.totalorder %s32, 1
      %p76 = por %p74, %p75
      %p78 = scmp.ne.s32.totalorder %s63, %s77
      %p79 = scmp.eq.s32.totalorder %s32, 0
      %p80 = por %p78, %p79
      %s82 = sadd.s32 %s81, 1
      %p85 = scmp.eq.s32.totalorder %s26, 1
      %p86 = scmp.ne.s32.totalorder %s81, %s83
      %p87 = scmp.eq.s32.totalorder %s26, 0
      %p88 = por %p86, %p87
      %p89 = scmp.ne.s32.totalorder %s81, %s83
      %p90 = scmp.eq.s32.totalorder %s31, 1
      %p91 = por %p89, %p90
      %p92 = scmp.ne.s32.totalorder %s83, %s84
      %p93 = scmp.eq.s32.totalorder %s31, 0
      %p94 = por %p92, %p93
      %p95 = scmp.ne.s32.totalorder %s83, %s84
      %p96 = scmp.eq.s32.totalorder %s32, 1
      %p97 = por %p95, %p96
      %p99 = scmp.ne.s32.totalorder %s84, %s98
      %p100 = scmp.eq.s32.totalorder %s32, 0
      %p101 = por %p99, %p100
      %s103 = sadd.s32 %s102, 1
      %p106 = scmp.eq.s32.totalorder %s26, 1
      %p107 = scmp.ne.s32.totalorder %s102, %s104
      %p108 = scmp.eq.s32.totalorder %s26, 0
      %p109 = por %p107, %p108
      %p110 = scmp.ne.s32.totalorder %s102, %s104
      %p111 = scmp.eq.s32.totalorder %s31, 1
      %p112 = por %p110, %p111
      %p113 = scmp.ne.s32.totalorder %s104, %s105
      %p114 = scmp.eq.s32.totalorder %s31, 0
      %p115 = por %p113, %p114
      %p116 = scmp.ne.s32.totalorder %s104, %s105
      %p117 = scmp.eq.s32.totalorder %s32, 1
      %p118 = por %p116, %p117
      %p120 = scmp.ne.s32.totalorder %s105, %s119
      %p121 = scmp.eq.s32.totalorder %s32, 0
      %p122 = por %p120, %p121
      %s124 = sadd.s32 %s123, 1
      %p127 = scmp.eq.s32.totalorder %s26, 1
      %p128 = scmp.ne.s32.totalorder %s123, %s125
      %p129 = scmp.eq.s32.totalorder %s26, 0
      %p130 = por %p128, %p129
      %p131 = scmp.ne.s32.totalorder %s123, %s125
      %p132 = scmp.eq.s32.totalorder %s31, 1
      %p133 = por %p131, %p132
      %p134 = scmp.ne.s32.totalorder %s125, %s126
      %p135 = scmp.eq.s32.totalorder %s31, 0
      %p136 = por %p134, %p135
      %p137 = scmp.ne.s32.totalorder %s125, %s126
      %p138 = scmp.eq.s32.totalorder %s32, 1
      %p139 = por %p137, %p138
      %p141 = scmp.ne.s32.totalorder %s126, %s140
      %p142 = scmp.eq.s32.totalorder %s32, 0
      %p143 = por %p141, %p142
      %s145 = sadd.s32 %s144, 1
      %p148 = scmp.eq.s32.totalorder %s26, 1
      %p149 = scmp.ne.s32.totalorder %s144, %s146
      %p150 = scmp.eq.s32.totalorder %s26, 0
      %p151 = por %p149, %p150
      %p152 = scmp.ne.s32.totalorder %s144, %s146
      %p153 = scmp.eq.s32.totalorder %s31, 1
      %p154 = por %p152, %p153
      %p155 = scmp.ne.s32.totalorder %s146, %s147
      %p156 = scmp.eq.s32.totalorder %s31, 0
      %p157 = por %p155, %p156
      %p158 = scmp.ne.s32.totalorder %s146, %s147
      %p159 = scmp.eq.s32.totalorder %s32, 1
      %p160 = por %p158, %p159
      %p162 = scmp.ne.s32.totalorder %s147, %s161
      %p163 = scmp.eq.s32.totalorder %s32, 0
      %p164 = por %p162, %p163
      %s166 = sadd.s32 %s165, 1
      %p169 = scmp.eq.s32.totalorder %s26, 1
      %p170 = scmp.ne.s32.totalorder %s165, %s167
      %p171 = scmp.eq.s32.totalorder %s26, 0
      %p172 = por %p170, %p171
      %p173 = scmp.ne.s32.totalorder %s165, %s167
      %p174 = scmp.eq.s32.totalorder %s31, 1
      %p175 = por %p173, %p174
      %p176 = scmp.ne.s32.totalorder %s167, %s168
      %p177 = scmp.eq.s32.totalorder %s31, 0
      %p178 = por %p176, %p177
      %p179 = scmp.ne.s32.totalorder %s167, %s168
      %p180 = scmp.eq.s32.totalorder %s32, 1
      %p181 = por %p179, %p180
      %p183 = scmp.ne.s32.totalorder %s168, %s182
      %p184 = scmp.eq.s32.totalorder %s32, 0
      %p185 = por %p183, %p184
      %s186 = ssub.s32 %s26, %s33
      %p187 = scmp.eq.s32.totalorder %s186, 0
      %s189 = sadd.s32 %s188, 1
      %s190 = scalar_select %p187, %s188, %s189
      %p193 = pneg %p187
      %p194 = scmp.eq.s32.totalorder %s26, 1
      %p195 = por %p193, %p194
      %p196 = scmp.ne.s32.totalorder %s188, %s191
      %p197 = scmp.eq.s32.totalorder %s26, 0
      %p198 = por %p196, %p197
      %p199 = scmp.ne.s32.totalorder %s188, %s191
      %p200 = scmp.eq.s32.totalorder %s31, 1
      %p201 = por %p199, %p200
      %p202 = scmp.ne.s32.totalorder %s191, %s192
      %p203 = scmp.eq.s32.totalorder %s31, 0
      %p204 = por %p202, %p203
      %p205 = scmp.ne.s32.totalorder %s191, %s192
      %p206 = scmp.eq.s32.totalorder %s32, 1
      %p207 = por %p205, %p206
      %p209 = scmp.ne.s32.totalorder %s192, %s208
      %p210 = scmp.eq.s32.totalorder %s32, 0
      %p211 = por %p209, %p210
      %s212 = ssub.s32 %s26, %s33
      %p213 = scmp.eq.s32.totalorder %s212, 0
      %s215 = sadd.s32 %s214, 1
      %s216 = scalar_select %p213, %s214, %s215
      %p219 = pneg %p213
      %p220 = scmp.eq.s32.totalorder %s26, 1
      %p221 = por %p219, %p220
      %p222 = scmp.ne.s32.totalorder %s214, %s217
      %p223 = scmp.eq.s32.totalorder %s26, 0
      %p224 = por %p222, %p223
      %p225 = scmp.ne.s32.totalorder %s214, %s217
      %p226 = scmp.eq.s32.totalorder %s31, 1
      %p227 = por %p225, %p226
      %p228 = scmp.ne.s32.totalorder %s217, %s218
      %p229 = scmp.eq.s32.totalorder %s31, 0
      %p230 = por %p228, %p229
      %p231 = scmp.ne.s32.totalorder %s217, %s218
      %p232 = scmp.eq.s32.totalorder %s32, 1
      %p233 = por %p231, %p232
      %p235 = scmp.ne.s32.totalorder %s218, %s234
      %p236 = scmp.eq.s32.totalorder %s32, 0
      %p237 = por %p235, %p236
      %p238 = scmp.le.s32.totalorder 1, %s26
      %p239 = scmp.lt.s32.totalorder %s26, 3
      %p240 = pnand %p238, %p239
      %p241 = pneg %p240
      // Predicated region
      $region9: #{tpu_custom_call.1} parent=5 // pred_check
        _
      $region10: #{tpu_custom_call.1} parent=5 // pred_check_branch
        %243 = sbr.rel (%p240) target = $region12
      $region11: #{tpu_custom_call.1} parent=5 // pred_region
        %s244 = ssub.s32 %s26, 1
        // Predicated region
        $region13: #{tpu_custom_call.1} parent=11 // pred_check
          %p245 = pneg %p73
        $region14: #{tpu_custom_call.1} parent=11 // pred_check_branch
          %247 = sbr.rel (%p245) target = $region16
        $region15: #{tpu_custom_call.1} parent=11 // pred_region
          %s249 = ssub.s32 2048, 2048
          %250 = vsyncadd [#allocation6], %s249
          %s251 = sshll.u32 [#allocation5], 4
          %s252 = int_to_ptr.vmem [resolvable:$true] %s251
          %257 = dma.hbm_to_vmem [thread:$0]  %s1, 2048, %s252, [#allocation6], 128, 128, 8
        $region16: #{tpu_custom_call.1} parent=11 // pred_fallthru
          _
        // Predicated region
        $region17: #{tpu_custom_call.1} parent=11 // pred_check
          %p258 = pneg %p94
        $region18: #{tpu_custom_call.1} parent=11 // pred_check_branch
          %260 = sbr.rel (%p258) target = $region20
        $region19: #{tpu_custom_call.1} parent=11 // pred_region
          _
        $region20: #{tpu_custom_call.1} parent=11 // pred_fallthru
          _
        // Predicated region
        $region21: #{tpu_custom_call.1} parent=11 // pred_check
          %p261 = pneg %p115
        $region22: #{tpu_custom_call.1} parent=11 // pred_check_branch
          %263 = sbr.rel (%p261) target = $region24
        $region23: #{tpu_custom_call.1} parent=11 // pred_region
          %s265 = ssub.s32 1024, 1024
          %266 = vsyncadd [#allocation6], %s265
          %s267 = sshll.u32 [#allocation7], 4
          %s268 = int_to_ptr.vmem [resolvable:$true] %s267
          %273 = dma.hbm_to_vmem [thread:$0]  %s3, 1024, %s268, [#allocation6], 64, 64, 4
        $region24: #{tpu_custom_call.1} parent=11 // pred_fallthru
          _
        // Predicated region
        $region25: #{tpu_custom_call.1} parent=11 // pred_check
          %p274 = pneg %p136
        $region26: #{tpu_custom_call.1} parent=11 // pred_check_branch
          %276 = sbr.rel (%p274) target = $region28
        $region27: #{tpu_custom_call.1} parent=11 // pred_region
          _
        $region28: #{tpu_custom_call.1} parent=11 // pred_fallthru
          _
        // Predicated region
        $region29: #{tpu_custom_call.1} parent=11 // pred_check
          %p277 = pneg %p157
        $region30: #{tpu_custom_call.1} parent=11 // pred_check_branch
          %279 = sbr.rel (%p277) target = $region32
        $region31: #{tpu_custom_call.1} parent=11 // pred_region
          %s281 = ssub.s32 1024, 1024
          %282 = vsyncadd [#allocation9], %s281
          %s283 = sshll.u32 [#allocation8], 4
          %s284 = int_to_ptr.vmem [resolvable:$true] %s283
          %289 = dma.hbm_to_vmem [thread:$0]  %s5, 1024, %s284, [#allocation9], 64, 64, 4
        $region32: #{tpu_custom_call.1} parent=11 // pred_fallthru
          _
        // Predicated region
        $region33: #{tpu_custom_call.1} parent=11 // pred_check
          %p290 = pneg %p178
        $region34: #{tpu_custom_call.1} parent=11 // pred_check_branch
          %292 = sbr.rel (%p290) target = $region36
        $region35: #{tpu_custom_call.1} parent=11 // pred_region
          _
        $region36: #{tpu_custom_call.1} parent=11 // pred_fallthru
          _
      $region12: #{tpu_custom_call.1} parent=5 // pred_fallthru
        _
      %p293 = scmp.lt.s32.totalorder %s26, 2
      // Predicated region
      $region37: #{tpu_custom_call.1} parent=5 // pred_check
        %p294 = pneg %p293
      $region38: #{tpu_custom_call.1} parent=5 // pred_check_branch
        %296 = sbr.rel (%p294) target = $region40
      $region39: #{tpu_custom_call.1} parent=5 // pred_region
        // Predicated region
        $region41: #{tpu_custom_call.1} parent=39 // pred_check
          %p297 = pneg %p46
        $region42: #{tpu_custom_call.1} parent=39 // pred_check_branch
          %299 = sbr.rel (%p297) target = $region44
        $region43: #{tpu_custom_call.1} parent=39 // pred_region
          %s300 = sand.u32 %s36, 1
          %s301 = scalar_lea.sflag [#allocation3], %s300
          %s302 = sand.u32 %s36, 1
          %s303 = smul.addr %s302, 64
          %s304 = scalar_lea.vmem [#allocation2], %s303
          %s305 = smul.u32 16, %s26
          %s307 = ssub.s32 1024, 1024
          %308 = vsyncadd %s301, %s307
          %s309 = smul.addr %s305, 64
          %s310 = scalar_lea.hbm %s0, %s309
          %s311 = sshll.u32 %s304, 4
          %s312 = int_to_ptr.vmem [resolvable:$true] %s311
          %317 = dma.hbm_to_vmem [thread:$0]  %s310, 1024, %s312, %s301, 64, 64, 4
        $region44: #{tpu_custom_call.1} parent=39 // pred_fallthru
          _
      $region40: #{tpu_custom_call.1} parent=5 // pred_fallthru
        _
      %p318 = scmp.le.s32.totalorder 1, %s26
      %p319 = scmp.lt.s32.totalorder %s26, 3
      %p320 = pnand %p318, %p319
      %p321 = pneg %p320
      // Predicated region
      $region45: #{tpu_custom_call.1} parent=5 // pred_check
        _
      $region46: #{tpu_custom_call.1} parent=5 // pred_check_branch
        %323 = sbr.rel (%p320) target = $region48
      $region47: #{tpu_custom_call.1} parent=5 // pred_region
        %s324 = ssub.s32 %s26, 1
        %s325 = sand.u32 %s39, 1
        %s326 = scalar_lea.sflag [#allocation3], %s325
        %s327 = sand.u32 %s39, 1
        %s328 = smul.addr %s327, 64
        %s329 = scalar_lea.vmem [#allocation2], %s328
        // Predicated region
        $region49: #{tpu_custom_call.1} parent=47 // pred_check
          %p330 = pneg %p52
        $region50: #{tpu_custom_call.1} parent=47 // pred_check_branch
          %332 = sbr.rel (%p330) target = $region52
        $region51: #{tpu_custom_call.1} parent=47 // pred_region
          %333 = dma.done %s326, 1024
        $region52: #{tpu_custom_call.1} parent=47 // pred_fallthru
          _
        // Predicated region
        $region53: #{tpu_custom_call.1} parent=47 // pred_check
          %p334 = pneg %p73
        $region54: #{tpu_custom_call.1} parent=47 // pred_check_branch
          %336 = sbr.rel (%p334) target = $region56
        $region55: #{tpu_custom_call.1} parent=47 // pred_region
          %337 = dma.done [#allocation6], 2048
        $region56: #{tpu_custom_call.1} parent=47 // pred_fallthru
          _
        // Predicated region
        $region57: #{tpu_custom_call.1} parent=47 // pred_check
          %p338 = pneg %p115
        $region58: #{tpu_custom_call.1} parent=47 // pred_check_branch
          %340 = sbr.rel (%p338) target = $region60
        $region59: #{tpu_custom_call.1} parent=47 // pred_region
          %341 = dma.done [#allocation6], 1024
        $region60: #{tpu_custom_call.1} parent=47 // pred_fallthru
          _
        // Predicated region
        $region61: #{tpu_custom_call.1} parent=47 // pred_check
          %p342 = pneg %p157
        $region62: #{tpu_custom_call.1} parent=47 // pred_check_branch
          %344 = sbr.rel (%p342) target = $region64
        $region63: #{tpu_custom_call.1} parent=47 // pred_region
          %345 = dma.done [#allocation9], 1024
        $region64: #{tpu_custom_call.1} parent=47 // pred_fallthru
          _
        %s346 = sand.u32 %s39, 1
        %s347 = scalar_lea.sflag [#allocation3], %s346
        %s348 = sand.u32 %s39, 1
        %s349 = smul.addr %s348, 64
        %s350 = scalar_lea.vmem [#allocation2], %s349
        %p351 = pneg %p52
        %p352 = pneg %p49
        %p353 = pneg %p73
        %p354 = pneg %p70
        %p355 = pneg %p94
        %p356 = pneg %p91
        %p357 = pneg %p115
        %p358 = pneg %p112
        %p359 = pneg %p136
        %p360 = pneg %p133
        %p361 = pneg %p157
        %p362 = pneg %p154
        %p363 = pneg %p178
        %p364 = pneg %p175
        %p365 = pneg %p204
        %p366 = pneg %p201
        %s367 = sand.u32 %s191, 1
        %s368 = scalar_lea.sflag [#allocation4], %s367
        %s369 = sand.u32 %s191, 1
        %s370 = smul.addr %s369, 128
        %s371 = scalar_lea.vmem [#allocation10], %s370
        %p372 = pneg %p230
        %p373 = pneg %p227
        %s374 = sand.u32 %s217, 1
        %s375 = scalar_lea.sflag [#allocation12], %s374
        %s376 = sand.u32 %s217, 1
        %s377 = smul.addr %s376, 64
        %s378 = scalar_lea.vmem [#allocation11], %s377
        %s379 = smul.u32 16, %s31
        %s380 = smul.u32 16, %s31
        %s381 = smul.u32 16, %s31
        %v383 = vld [vmem:[%s329] sm:$0xf]
        %v384 = vld [vmem:[%s329 + $0x4] sm:$0xf]
        %v385 = vld [vmem:[%s329 + $0x8] sm:$0xf]
        %v386 = vld [vmem:[%s329 + $0xc] sm:$0xf]
        %v387 = vld [vmem:[%s329 + $0x10] sm:$0xf]
        %v388 = vld [vmem:[%s329 + $0x14] sm:$0xf]
        %v389 = vld [vmem:[%s329 + $0x18] sm:$0xf]
        %v390 = vld [vmem:[%s329 + $0x1c] sm:$0xf]
        %v391 = vld [vmem:[%s329 + $0x20] sm:$0xf]
        %v392 = vld [vmem:[%s329 + $0x24] sm:$0xf]
        %v393 = vld [vmem:[%s329 + $0x28] sm:$0xf]
        %v394 = vld [vmem:[%s329 + $0x2c] sm:$0xf]
        %v395 = vld [vmem:[%s329 + $0x30] sm:$0xf]
        %v396 = vld [vmem:[%s329 + $0x34] sm:$0xf]
        %v397 = vld [vmem:[%s329 + $0x38] sm:$0xf]
        %v398 = vld [vmem:[%s329 + $0x3c] sm:$0xf]
        %v399 = vld [vmem:[#allocation5] sm:$0xff]
        %v400 = vld [vmem:[#allocation5 + $0x8] sm:$0xff]
        %v401 = vld [vmem:[#allocation5 + $0x10] sm:$0xff]
        %v402 = vld [vmem:[#allocation5 + $0x18] sm:$0xff]
        %v403 = vld [vmem:[#allocation5 + $0x20] sm:$0xff]
        %v404 = vld [vmem:[#allocation5 + $0x28] sm:$0xff]
        %v405 = vld [vmem:[#allocation5 + $0x30] sm:$0xff]
        %v406 = vld [vmem:[#allocation5 + $0x38] sm:$0xff]
        %v407 = vld [vmem:[#allocation5 + $0x40] sm:$0xff]
        %v408 = vld [vmem:[#allocation5 + $0x48] sm:$0xff]
        %v409 = vld [vmem:[#allocation5 + $0x50] sm:$0xff]
        %v410 = vld [vmem:[#allocation5 + $0x58] sm:$0xff]
        %v411 = vld [vmem:[#allocation5 + $0x60] sm:$0xff]
        %v412 = vld [vmem:[#allocation5 + $0x68] sm:$0xff]
        %v413 = vld [vmem:[#allocation5 + $0x70] sm:$0xff]
        %v414 = vld [vmem:[#allocation5 + $0x78] sm:$0xff]
        %v415 = vld [vmem:[%s2] sm:$0x3]
        %v417 = vlaneseq
        %v418 = vshrl.u32 %v417, 7
        %v419 = vsub.s32 0, %v418
        %v420 = vrot.slane %v415, %v419
        %v421 = vlaneseq
        %v422 = vshrl.u32 %v421, 7
        %v423 = vsub.s32 1, %v422
        %v424 = vrot.slane %v415, %v423
        %v443 = vunpack.c.l.b16 %v383
        %v444 = vunpack.c.l.b16 %v384
        %v445 = vunpack.c.l.b16 %v385
        %v446 = vunpack.c.l.b16 %v386
        %v447 = vunpack.c.l.b16 %v387
        %v448 = vunpack.c.l.b16 %v388
        %v449 = vunpack.c.l.b16 %v389
        %v450 = vunpack.c.l.b16 %v390
        %v451 = vunpack.c.l.b16 %v391
        %v452 = vunpack.c.l.b16 %v392
        %v453 = vunpack.c.l.b16 %v393
        %v454 = vunpack.c.l.b16 %v394
        %v455 = vunpack.c.l.b16 %v395
        %v456 = vunpack.c.l.b16 %v396
        %v457 = vunpack.c.l.b16 %v397
        %v458 = vunpack.c.l.b16 %v398
        %v459 = vpack.c.b16 %v444, %v443
        %v460 = vpack.c.b16 %v446, %v445
        %v461 = vpack.c.b16 %v448, %v447
        %v462 = vpack.c.b16 %v450, %v449
        %v463 = vpack.c.b16 %v452, %v451
        %v464 = vpack.c.b16 %v454, %v453
        %v465 = vpack.c.b16 %v456, %v455
        %v466 = vpack.c.b16 %v458, %v457
        %v491 = vunpack.c.l.b16 %v399
        %v492 = vunpack.c.h.b16 %v399
        %v493 = vunpack.c.l.b16 %v400
        %v494 = vunpack.c.h.b16 %v400
        %v495 = vunpack.c.l.b16 %v401
        %v496 = vunpack.c.h.b16 %v401
        %v497 = vunpack.c.l.b16 %v402
        %v498 = vunpack.c.h.b16 %v402
        %v499 = vunpack.c.l.b16 %v403
        %v500 = vunpack.c.h.b16 %v403
        %v501 = vunpack.c.l.b16 %v404
        %v502 = vunpack.c.h.b16 %v404
        %v503 = vunpack.c.l.b16 %v405
        %v504 = vunpack.c.h.b16 %v405
        %v505 = vunpack.c.l.b16 %v406
        %v506 = vunpack.c.h.b16 %v406
        %v507 = vunpack.c.l.b16 %v407
        %v508 = vunpack.c.h.b16 %v407
        %v509 = vunpack.c.l.b16 %v408
        %v510 = vunpack.c.h.b16 %v408
        %v511 = vunpack.c.l.b16 %v409
        %v512 = vunpack.c.h.b16 %v409
        %v513 = vunpack.c.l.b16 %v410
        %v514 = vunpack.c.h.b16 %v410
        %v515 = vunpack.c.l.b16 %v411
        %v516 = vunpack.c.h.b16 %v411
        %v517 = vunpack.c.l.b16 %v412
        %v518 = vunpack.c.h.b16 %v412
        %v519 = vunpack.c.l.b16 %v413
        %v520 = vunpack.c.h.b16 %v413
        %v521 = vunpack.c.l.b16 %v414
        %v522 = vunpack.c.h.b16 %v414
        %v523 = vpack.c.b16 %v493, %v491
        %v524 = vpack.c.b16 %v494, %v492
        %v525 = vpack.c.b16 %v497, %v495
        %v526 = vpack.c.b16 %v498, %v496
        %v527 = vpack.c.b16 %v501, %v499
        %v528 = vpack.c.b16 %v502, %v500
        %v529 = vpack.c.b16 %v505, %v503
        %v530 = vpack.c.b16 %v506, %v504
        %v531 = vpack.c.b16 %v509, %v507
        %v532 = vpack.c.b16 %v510, %v508
        %v533 = vpack.c.b16 %v513, %v511
        %v534 = vpack.c.b16 %v514, %v512
        %v535 = vpack.c.b16 %v517, %v515
        %v536 = vpack.c.b16 %v518, %v516
        %v537 = vpack.c.b16 %v521, %v519
        %v538 = vpack.c.b16 %v522, %v520
        %555 = vmatprep.subr.bf16.mxu0 %v524
        %556 = vmatpush1.bf16.msra.mxu0 %v523
        %557 = vmatprep.subr.bf16.mxu0 %v526
        %558 = vmatpush1.bf16.msra.mxu0 %v525
        %559 = vmatprep.subr.bf16.mxu0 %v528
        %560 = vmatpush1.bf16.msra.mxu0 %v527
        %561 = vmatprep.subr.bf16.mxu0 %v530
        %562 = vmatpush1.bf16.msra.mxu0 %v529
        %563 = vmatprep.subr.bf16.mxu0 %v532
        %564 = vmatpush1.bf16.msra.mxu0 %v531
        %565 = vmatprep.subr.bf16.mxu0 %v534
        %566 = vmatpush1.bf16.msra.mxu0 %v533
        %567 = vmatprep.subr.bf16.mxu0 %v536
        %568 = vmatpush1.bf16.msra.mxu0 %v535
        %569 = vmatprep.subr.bf16.mxu0 %v538
        %570 = vmatpush1.bf16.msra.mxu0 %v537
        %571 = vmatprep.subr.bf16.mxu0 0
        %572 = vmatpush1.bf16.msra.mxu0 0
        %573 = vmatprep.subr.bf16.mxu0 0
        %574 = vmatpush1.bf16.msra.mxu0 0
        %575 = vmatprep.subr.bf16.mxu0 0
        %576 = vmatpush1.bf16.msra.mxu0 0
        %577 = vmatprep.subr.bf16.mxu0 0
        %578 = vmatpush1.bf16.msra.mxu0 0
        %579 = vmatprep.subr.bf16.mxu0 0
        %580 = vmatpush1.bf16.msra.mxu0 0
        %581 = vmatprep.subr.bf16.mxu0 0
        %582 = vmatpush1.bf16.msra.mxu0 0
        %583 = vmatprep.subr.bf16.mxu0 0
        %584 = vmatpush1.bf16.msra.mxu0 0
        %585 = vmatprep.subr.bf16.mxu0 0
        %586 = vmatpush1.bf16.msra.mxu0 0
        %587 = vmatprep.mubr.bf16.mxu0 0
        %588 = vmatmul.mubr.bf16.gmra.mrb[0].mxu0 %v459
        %v589 = vpop.f32.mrb[0].mxu0
        %v590 = vadd.f32 %v420, %v589
        %v591 = vpop.f32.mrb[0].mxu0
        %v592 = vadd.f32 %v424, %v591
        %v593 = vpop.f32.mrb[0].mxu0
        %v594 = vadd.f32 %v420, %v593
        %v595 = vpop.f32.mrb[0].mxu0
        %v596 = vadd.f32 %v424, %v595
        %597 = vmatprep.mubr.bf16.mxu0 0
        %598 = vmatmul.mubr.bf16.gmra.mrb[0].mxu0 %v460
        %v599 = vpop.f32.mrb[0].mxu0
        %v600 = vadd.f32 %v420, %v599
        %v601 = vpop.f32.mrb[0].mxu0
        %v602 = vadd.f32 %v424, %v601
        %v603 = vpop.f32.mrb[0].mxu0
        %v604 = vadd.f32 %v420, %v603
        %v605 = vpop.f32.mrb[0].mxu0
        %v606 = vadd.f32 %v424, %v605
        %607 = vmatprep.mubr.bf16.mxu0 0
        %608 = vmatmul.mubr.bf16.gmra.mrb[0].mxu0 %v461
        %v609 = vpop.f32.mrb[0].mxu0
        %v610 = vadd.f32 %v420, %v609
        %v611 = vpop.f32.mrb[0].mxu0
        %v612 = vadd.f32 %v424, %v611
        %v613 = vpop.f32.mrb[0].mxu0
        %v614 = vadd.f32 %v420, %v613
        %v615 = vpop.f32.mrb[0].mxu0
        %v616 = vadd.f32 %v424, %v615
        %617 = vmatprep.mubr.bf16.mxu0 0
        %618 = vmatmul.mubr.bf16.gmra.mrb[0].mxu0 %v462
        %v619 = vpop.f32.mrb[0].mxu0
        %v620 = vadd.f32 %v420, %v619
        %v621 = vpop.f32.mrb[0].mxu0
        %v622 = vadd.f32 %v424, %v621
        %v623 = vpop.f32.mrb[0].mxu0
        %v624 = vadd.f32 %v420, %v623
        %v625 = vpop.f32.mrb[0].mxu0
        %v626 = vadd.f32 %v424, %v625
        %627 = vmatprep.mubr.bf16.mxu0 0
        %628 = vmatmul.mubr.bf16.gmra.mrb[0].mxu0 %v463
        %v629 = vpop.f32.mrb[0].mxu0
        %v630 = vadd.f32 %v420, %v629
        %v631 = vpop.f32.mrb[0].mxu0
        %v632 = vadd.f32 %v424, %v631
        %v633 = vpop.f32.mrb[0].mxu0
        %v634 = vadd.f32 %v420, %v633
        %v635 = vpop.f32.mrb[0].mxu0
        %v636 = vadd.f32 %v424, %v635
        %637 = vmatprep.mubr.bf16.mxu0 0
        %638 = vmatmul.mubr.bf16.gmra.mrb[0].mxu0 %v464
        %v639 = vpop.f32.mrb[0].mxu0
        %v640 = vadd.f32 %v420, %v639
        %v641 = vpop.f32.mrb[0].mxu0
        %v642 = vadd.f32 %v424, %v641
        %v643 = vpop.f32.mrb[0].mxu0
        %v644 = vadd.f32 %v420, %v643
        %v645 = vpop.f32.mrb[0].mxu0
        %v646 = vadd.f32 %v424, %v645
        %647 = vmatprep.mubr.bf16.mxu0 0
        %648 = vmatmul.mubr.bf16.gmra.mrb[0].mxu0 %v465
        %v649 = vpop.f32.mrb[0].mxu0
        %v650 = vadd.f32 %v420, %v649
        %v651 = vpop.f32.mrb[0].mxu0
        %v652 = vadd.f32 %v424, %v651
        %v653 = vpop.f32.mrb[0].mxu0
        %v654 = vadd.f32 %v420, %v653
        %v655 = vpop.f32.mrb[0].mxu0
        %v656 = vadd.f32 %v424, %v655
        %657 = vmatprep.mubr.bf16.mxu0 0
        %658 = vmatmul.mubr.bf16.gmra.mrb[0].mxu0 %v466
        %v659 = vpop.f32.mrb[0].mxu0
        %v660 = vadd.f32 %v420, %v659
        %v661 = vpop.f32.mrb[0].mxu0
        %v662 = vadd.f32 %v424, %v661
        %v663 = vpop.f32.mrb[0].mxu0
        %v664 = vadd.f32 %v420, %v663
        %v665 = vpop.f32.mrb[0].mxu0
        %v666 = vadd.f32 %v424, %v665
        %667 = vdwg.mxu0
        %v668 = vmax.f32 %v590, 0.0
        %v669 = vmax.f32 %v592, 0.0
        %v670 = vmax.f32 %v594, 0.0
        %v671 = vmax.f32 %v596, 0.0
        %v672 = vmax.f32 %v600, 0.0
        %v673 = vmax.f32 %v602, 0.0
        %v674 = vmax.f32 %v604, 0.0
        %v675 = vmax.f32 %v606, 0.0
        %v676 = vmax.f32 %v610, 0.0
        %v677 = vmax.f32 %v612, 0.0
        %v678 = vmax.f32 %v614, 0.0
        %v679 = vmax.f32 %v616, 0.0
        %v680 = vmax.f32 %v620, 0.0
        %v681 = vmax.f32 %v622, 0.0
        %v682 = vmax.f32 %v624, 0.0
        %v683 = vmax.f32 %v626, 0.0
        %v684 = vmax.f32 %v630, 0.0
        %v685 = vmax.f32 %v632, 0.0
        %v686 = vmax.f32 %v634, 0.0
        %v687 = vmax.f32 %v636, 0.0
        %v688 = vmax.f32 %v640, 0.0
        %v689 = vmax.f32 %v642, 0.0
        %v690 = vmax.f32 %v644, 0.0
        %v691 = vmax.f32 %v646, 0.0
        %v692 = vmax.f32 %v650, 0.0
        %v693 = vmax.f32 %v652, 0.0
        %v694 = vmax.f32 %v654, 0.0
        %v695 = vmax.f32 %v656, 0.0
        %v696 = vmax.f32 %v660, 0.0
        %v697 = vmax.f32 %v662, 0.0
        %v698 = vmax.f32 %v664, 0.0
        %v699 = vmax.f32 %v666, 0.0
        %v700 = vpack.c.bf16 %v670, %v668
        %v701 = vpack.c.bf16 %v671, %v669
        %v702 = vpack.c.bf16 %v674, %v672
        %v703 = vpack.c.bf16 %v675, %v673
        %v704 = vpack.c.bf16 %v678, %v676
        %v705 = vpack.c.bf16 %v679, %v677
        %v706 = vpack.c.bf16 %v682, %v680
        %v707 = vpack.c.bf16 %v683, %v681
        %v708 = vpack.c.bf16 %v686, %v684
        %v709 = vpack.c.bf16 %v687, %v685
        %v710 = vpack.c.bf16 %v690, %v688
        %v711 = vpack.c.bf16 %v691, %v689
        %v712 = vpack.c.bf16 %v694, %v692
        %v713 = vpack.c.bf16 %v695, %v693
        %v714 = vpack.c.bf16 %v698, %v696
        %v715 = vpack.c.bf16 %v699, %v697
        %v716 = vld [vmem:[#allocation7] sm:$0xf]
        %v717 = vld [vmem:[#allocation7 + $0x4] sm:$0xf]
        %v718 = vld [vmem:[#allocation7 + $0x8] sm:$0xf]
        %v719 = vld [vmem:[#allocation7 + $0xc] sm:$0xf]
        %v720 = vld [vmem:[#allocation7 + $0x10] sm:$0xf]
        %v721 = vld [vmem:[#allocation7 + $0x14] sm:$0xf]
        %v722 = vld [vmem:[#allocation7 + $0x18] sm:$0xf]
        %v723 = vld [vmem:[#allocation7 + $0x1c] sm:$0xf]
        %v724 = vld [vmem:[#allocation7 + $0x20] sm:$0xf]
        %v725 = vld [vmem:[#allocation7 + $0x24] sm:$0xf]
        %v726 = vld [vmem:[#allocation7 + $0x28] sm:$0xf]
        %v727 = vld [vmem:[#allocation7 + $0x2c] sm:$0xf]
        %v728 = vld [vmem:[#allocation7 + $0x30] sm:$0xf]
        %v729 = vld [vmem:[#allocation7 + $0x34] sm:$0xf]
        %v730 = vld [vmem:[#allocation7 + $0x38] sm:$0xf]
        %v731 = vld [vmem:[#allocation7 + $0x3c] sm:$0xf]
        %v732 = vld [vmem:[%s4] sm:$0x1]
        %v734 = vlaneseq
        %v735 = vshrl.u32 %v734, 7
        %v736 = vsub.s32 0, %v735
        %v737 = vrot.slane %v732, %v736
        %v755 = vunpack.c.l.b16 %v716
        %v756 = vunpack.c.l.b16 %v717
        %v757 = vunpack.c.l.b16 %v718
        %v758 = vunpack.c.l.b16 %v719
        %v759 = vunpack.c.l.b16 %v720
        %v760 = vunpack.c.l.b16 %v721
        %v761 = vunpack.c.l.b16 %v722
        %v762 = vunpack.c.l.b16 %v723
        %v763 = vunpack.c.l.b16 %v724
        %v764 = vunpack.c.l.b16 %v725
        %v765 = vunpack.c.l.b16 %v726
        %v766 = vunpack.c.l.b16 %v727
        %v767 = vunpack.c.l.b16 %v728
        %v768 = vunpack.c.l.b16 %v729
        %v769 = vunpack.c.l.b16 %v730
        %v770 = vunpack.c.l.b16 %v731
        %v771 = vpack.c.b16 %v756, %v755
        %v772 = vpack.c.b16 %v758, %v757
        %v773 = vpack.c.b16 %v760, %v759
        %v774 = vpack.c.b16 %v762, %v761
        %v775 = vpack.c.b16 %v764, %v763
        %v776 = vpack.c.b16 %v766, %v765
        %v777 = vpack.c.b16 %v768, %v767
        %v778 = vpack.c.b16 %v770, %v769
        %787 = vmatprep.subr.bf16.mxu0 0
        %788 = vmatpush1.bf16.msra.mxu0 %v771
        %789 = vmatprep.subr.bf16.mxu0 0
        %790 = vmatpush1.bf16.msra.mxu0 %v772
        %791 = vmatprep.subr.bf16.mxu0 0
        %792 = vmatpush1.bf16.msra.mxu0 %v773
        %793 = vmatprep.subr.bf16.mxu0 0
        %794 = vmatpush1.bf16.msra.mxu0 %v774
        %795 = vmatprep.subr.bf16.mxu0 0
        %796 = vmatpush1.bf16.msra.mxu0 %v775
        %797 = vmatprep.subr.bf16.mxu0 0
        %798 = vmatpush1.bf16.msra.mxu0 %v776
        %799 = vmatprep.subr.bf16.mxu0 0
        %800 = vmatpush1.bf16.msra.mxu0 %v777
        %801 = vmatprep.subr.bf16.mxu0 0
        %802 = vmatpush1.bf16.msra.mxu0 %v778
        %803 = vmatprep.subr.bf16.mxu0 0
        %804 = vmatpush1.bf16.msra.mxu0 0
        %805 = vmatprep.subr.bf16.mxu0 0
        %806 = vmatpush1.bf16.msra.mxu0 0
        %807 = vmatprep.subr.bf16.mxu0 0
        %808 = vmatpush1.bf16.msra.mxu0 0
        %809 = vmatprep.subr.bf16.mxu0 0
        %810 = vmatpush1.bf16.msra.mxu0 0
        %811 = vmatprep.subr.bf16.mxu0 0
        %812 = vmatpush1.bf16.msra.mxu0 0
        %813 = vmatprep.subr.bf16.mxu0 0
        %814 = vmatpush1.bf16.msra.mxu0 0
        %815 = vmatprep.subr.bf16.mxu0 0
        %816 = vmatpush1.bf16.msra.mxu0 0
        %817 = vmatprep.subr.bf16.mxu0 0
        %818 = vmatpush1.bf16.msra.mxu0 0
        %819 = vmatprep.mubr.bf16.mxu0 0
        %820 = vmatmul.mubr.bf16.gmra.mrb[0].mxu0 %v700
        %v821 = vpop.f32.mrb[0].mxu0
        %v822 = vadd.f32 %v737, %v821
        %v823 = vpop.f32.mrb[0].mxu0
        %v824 = vpop.f32.mrb[0].mxu0
        %v825 = vadd.f32 %v737, %v824
        %v826 = vpop.f32.mrb[0].mxu0
        %827 = vmatprep.mubr.bf16.mxu0 0
        %828 = vmatmul.mubr.bf16.gmra.mrb[0].mxu0 %v702
        %v829 = vpop.f32.mrb[0].mxu0
        %v830 = vadd.f32 %v737, %v829
        %v831 = vpop.f32.mrb[0].mxu0
        %v832 = vpop.f32.mrb[0].mxu0
        %v833 = vadd.f32 %v737, %v832
        %v834 = vpop.f32.mrb[0].mxu0
        %835 = vmatprep.mubr.bf16.mxu0 0
        %836 = vmatmul.mubr.bf16.gmra.mrb[0].mxu0 %v704
        %v837 = vpop.f32.mrb[0].mxu0
        %v838 = vadd.f32 %v737, %v837
        %v839 = vpop.f32.mrb[0].mxu0
        %v840 = vpop.f32.mrb[0].mxu0
        %v841 = vadd.f32 %v737, %v840
        %v842 = vpop.f32.mrb[0].mxu0
        %843 = vmatprep.mubr.bf16.mxu0 0
        %844 = vmatmul.mubr.bf16.gmra.mrb[0].mxu0 %v706
        %v845 = vpop.f32.mrb[0].mxu0
        %v846 = vadd.f32 %v737, %v845
        %v847 = vpop.f32.mrb[0].mxu0
        %v848 = vpop.f32.mrb[0].mxu0
        %v849 = vadd.f32 %v737, %v848
        %v850 = vpop.f32.mrb[0].mxu0
        %851 = vmatprep.mubr.bf16.mxu0 0
        %852 = vmatmul.mubr.bf16.gmra.mrb[0].mxu0 %v708
        %v853 = vpop.f32.mrb[0].mxu0
        %v854 = vadd.f32 %v737, %v853
        %v855 = vpop.f32.mrb[0].mxu0
        %v856 = vpop.f32.mrb[0].mxu0
        %v857 = vadd.f32 %v737, %v856
        %v858 = vpop.f32.mrb[0].mxu0
        %859 = vmatprep.mubr.bf16.mxu0 0
        %860 = vmatmul.mubr.bf16.gmra.mrb[0].mxu0 %v710
        %v861 = vpop.f32.mrb[0].mxu0
        %v862 = vadd.f32 %v737, %v861
        %v863 = vpop.f32.mrb[0].mxu0
        %v864 = vpop.f32.mrb[0].mxu0
        %v865 = vadd.f32 %v737, %v864
        %v866 = vpop.f32.mrb[0].mxu0
        %867 = vmatprep.mubr.bf16.mxu0 0
        %868 = vmatmul.mubr.bf16.gmra.mrb[0].mxu0 %v712
        %v869 = vpop.f32.mrb[0].mxu0
        %v870 = vadd.f32 %v737, %v869
        %v871 = vpop.f32.mrb[0].mxu0
        %v872 = vpop.f32.mrb[0].mxu0
        %v873 = vadd.f32 %v737, %v872
        %v874 = vpop.f32.mrb[0].mxu0
        %875 = vmatprep.mubr.bf16.mxu0 0
        %876 = vmatmul.mubr.bf16.gmra.mrb[0].mxu0 %v714
        %v877 = vpop.f32.mrb[0].mxu0
        %v878 = vadd.f32 %v737, %v877
        %v879 = vpop.f32.mrb[0].mxu0
        %v880 = vpop.f32.mrb[0].mxu0
        %v881 = vadd.f32 %v737, %v880
        %v882 = vpop.f32.mrb[0].mxu0
        %883 = vdwg.mxu0
        %v884 = vld [vmem:[#allocation8] sm:$0xf]
        %v885 = vld [vmem:[#allocation8 + $0x4] sm:$0xf]
        %v886 = vld [vmem:[#allocation8 + $0x8] sm:$0xf]
        %v887 = vld [vmem:[#allocation8 + $0xc] sm:$0xf]
        %v888 = vld [vmem:[#allocation8 + $0x10] sm:$0xf]
        %v889 = vld [vmem:[#allocation8 + $0x14] sm:$0xf]
        %v890 = vld [vmem:[#allocation8 + $0x18] sm:$0xf]
        %v891 = vld [vmem:[#allocation8 + $0x1c] sm:$0xf]
        %v892 = vld [vmem:[#allocation8 + $0x20] sm:$0xf]
        %v893 = vld [vmem:[#allocation8 + $0x24] sm:$0xf]
        %v894 = vld [vmem:[#allocation8 + $0x28] sm:$0xf]
        %v895 = vld [vmem:[#allocation8 + $0x2c] sm:$0xf]
        %v896 = vld [vmem:[#allocation8 + $0x30] sm:$0xf]
        %v897 = vld [vmem:[#allocation8 + $0x34] sm:$0xf]
        %v898 = vld [vmem:[#allocation8 + $0x38] sm:$0xf]
        %v899 = vld [vmem:[#allocation8 + $0x3c] sm:$0xf]
        %v900 = vld [vmem:[%s6] sm:$0x1]
        %v902 = vlaneseq
        %v903 = vshrl.u32 %v902, 7
        %v904 = vsub.s32 0, %v903
        %v905 = vrot.slane %v900, %v904
        %v923 = vunpack.c.l.b16 %v884
        %v924 = vunpack.c.l.b16 %v885
        %v925 = vunpack.c.l.b16 %v886
        %v926 = vunpack.c.l.b16 %v887
        %v927 = vunpack.c.l.b16 %v888
        %v928 = vunpack.c.l.b16 %v889
        %v929 = vunpack.c.l.b16 %v890
        %v930 = vunpack.c.l.b16 %v891
        %v931 = vunpack.c.l.b16 %v892
        %v932 = vunpack.c.l.b16 %v893
        %v933 = vunpack.c.l.b16 %v894
        %v934 = vunpack.c.l.b16 %v895
        %v935 = vunpack.c.l.b16 %v896
        %v936 = vunpack.c.l.b16 %v897
        %v937 = vunpack.c.l.b16 %v898
        %v938 = vunpack.c.l.b16 %v899
        %v939 = vpack.c.b16 %v924, %v923
        %v940 = vpack.c.b16 %v926, %v925
        %v941 = vpack.c.b16 %v928, %v927
        %v942 = vpack.c.b16 %v930, %v929
        %v943 = vpack.c.b16 %v932, %v931
        %v944 = vpack.c.b16 %v934, %v933
        %v945 = vpack.c.b16 %v936, %v935
        %v946 = vpack.c.b16 %v938, %v937
        %955 = vmatprep.subr.bf16.mxu0 0
        %956 = vmatpush1.bf16.msra.mxu0 %v939
        %957 = vmatprep.subr.bf16.mxu0 0
        %958 = vmatpush1.bf16.msra.mxu0 %v940
        %959 = vmatprep.subr.bf16.mxu0 0
        %960 = vmatpush1.bf16.msra.mxu0 %v941
        %961 = vmatprep.subr.bf16.mxu0 0
        %962 = vmatpush1.bf16.msra.mxu0 %v942
        %963 = vmatprep.subr.bf16.mxu0 0
        %964 = vmatpush1.bf16.msra.mxu0 %v943
        %965 = vmatprep.subr.bf16.mxu0 0
        %966 = vmatpush1.bf16.msra.mxu0 %v944
        %967 = vmatprep.subr.bf16.mxu0 0
        %968 = vmatpush1.bf16.msra.mxu0 %v945
        %969 = vmatprep.subr.bf16.mxu0 0
        %970 = vmatpush1.bf16.msra.mxu0 %v946
        %971 = vmatprep.subr.bf16.mxu0 0
        %972 = vmatpush1.bf16.msra.mxu0 0
        %973 = vmatprep.subr.bf16.mxu0 0
        %974 = vmatpush1.bf16.msra.mxu0 0
        %975 = vmatprep.subr.bf16.mxu0 0
        %976 = vmatpush1.bf16.msra.mxu0 0
        %977 = vmatprep.subr.bf16.mxu0 0
        %978 = vmatpush1.bf16.msra.mxu0 0
        %979 = vmatprep.subr.bf16.mxu0 0
        %980 = vmatpush1.bf16.msra.mxu0 0
        %981 = vmatprep.subr.bf16.mxu0 0
        %982 = vmatpush1.bf16.msra.mxu0 0
        %983 = vmatprep.subr.bf16.mxu0 0
        %984 = vmatpush1.bf16.msra.mxu0 0
        %985 = vmatprep.subr.bf16.mxu0 0
        %986 = vmatpush1.bf16.msra.mxu0 0
        %987 = vmatprep.mubr.bf16.mxu0 0
        %988 = vmatmul.mubr.bf16.gmra.mrb[0].mxu0 %v701
        %v989 = vpop.f32.mrb[0].mxu0
        %v990 = vadd.f32 %v905, %v989
        %v991 = vpop.f32.mrb[0].mxu0
        %v992 = vpop.f32.mrb[0].mxu0
        %v993 = vadd.f32 %v905, %v992
        %v994 = vpop.f32.mrb[0].mxu0
        %995 = vmatprep.mubr.bf16.mxu0 0
        %996 = vmatmul.mubr.bf16.gmra.mrb[0].mxu0 %v703
        %v997 = vpop.f32.mrb[0].mxu0
        %v998 = vadd.f32 %v905, %v997
        %v999 = vpop.f32.mrb[0].mxu0
        %v1000 = vpop.f32.mrb[0].mxu0
        %v1001 = vadd.f32 %v905, %v1000
        %v1002 = vpop.f32.mrb[0].mxu0
        %1003 = vmatprep.mubr.bf16.mxu0 0
        %1004 = vmatmul.mubr.bf16.gmra.mrb[0].mxu0 %v705
        %v1005 = vpop.f32.mrb[0].mxu0
        %v1006 = vadd.f32 %v905, %v1005
        %v1007 = vpop.f32.mrb[0].mxu0
        %v1008 = vpop.f32.mrb[0].mxu0
        %v1009 = vadd.f32 %v905, %v1008
        %v1010 = vpop.f32.mrb[0].mxu0
        %1011 = vmatprep.mubr.bf16.mxu0 0
        %1012 = vmatmul.mubr.bf16.gmra.mrb[0].mxu0 %v707
        %v1013 = vpop.f32.mrb[0].mxu0
        %v1014 = vadd.f32 %v905, %v1013
        %v1015 = vpop.f32.mrb[0].mxu0
        %v1016 = vpop.f32.mrb[0].mxu0
        %v1017 = vadd.f32 %v905, %v1016
        %v1018 = vpop.f32.mrb[0].mxu0
        %1019 = vmatprep.mubr.bf16.mxu0 0
        %1020 = vmatmul.mubr.bf16.gmra.mrb[0].mxu0 %v709
        %v1021 = vpop.f32.mrb[0].mxu0
        %v1022 = vadd.f32 %v905, %v1021
        %v1023 = vpop.f32.mrb[0].mxu0
        %v1024 = vpop.f32.mrb[0].mxu0
        %v1025 = vadd.f32 %v905, %v1024
        %v1026 = vpop.f32.mrb[0].mxu0
        %1027 = vmatprep.mubr.bf16.mxu0 0
        %1028 = vmatmul.mubr.bf16.gmra.mrb[0].mxu0 %v711
        %v1029 = vpop.f32.mrb[0].mxu0
        %v1030 = vadd.f32 %v905, %v1029
        %v1031 = vpop.f32.mrb[0].mxu0
        %v1032 = vpop.f32.mrb[0].mxu0
        %v1033 = vadd.f32 %v905, %v1032
        %v1034 = vpop.f32.mrb[0].mxu0
        %1035 = vmatprep.mubr.bf16.mxu0 0
        %1036 = vmatmul.mubr.bf16.gmra.mrb[0].mxu0 %v713
        %v1037 = vpop.f32.mrb[0].mxu0
        %v1038 = vadd.f32 %v905, %v1037
        %v1039 = vpop.f32.mrb[0].mxu0
        %v1040 = vpop.f32.mrb[0].mxu0
        %v1041 = vadd.f32 %v905, %v1040
        %v1042 = vpop.f32.mrb[0].mxu0
        %1043 = vmatprep.mubr.bf16.mxu0 0
        %1044 = vmatmul.mubr.bf16.gmra.mrb[0].mxu0 %v715
        %v1045 = vpop.f32.mrb[0].mxu0
        %v1046 = vadd.f32 %v905, %v1045
        %v1047 = vpop.f32.mrb[0].mxu0
        %v1048 = vpop.f32.mrb[0].mxu0
        %v1049 = vadd.f32 %v905, %v1048
        %v1050 = vpop.f32.mrb[0].mxu0
        %1051 = vdwg.mxu0
        %1052 = vst [vmem:[%s371] sm:$0xff] %v822
        %1053 = vst [vmem:[%s371 + $0x8] sm:$0xff] %v825
        %1054 = vst [vmem:[%s371 + $0x10] sm:$0xff] %v830
        %1055 = vst [vmem:[%s371 + $0x18] sm:$0xff] %v833
        %1056 = vst [vmem:[%s371 + $0x20] sm:$0xff] %v838
        %1057 = vst [vmem:[%s371 + $0x28] sm:$0xff] %v841
        %1058 = vst [vmem:[%s371 + $0x30] sm:$0xff] %v846
        %1059 = vst [vmem:[%s371 + $0x38] sm:$0xff] %v849
        %1060 = vst [vmem:[%s371 + $0x40] sm:$0xff] %v854
        %1061 = vst [vmem:[%s371 + $0x48] sm:$0xff] %v857
        %1062 = vst [vmem:[%s371 + $0x50] sm:$0xff] %v862
        %1063 = vst [vmem:[%s371 + $0x58] sm:$0xff] %v865
        %1064 = vst [vmem:[%s371 + $0x60] sm:$0xff] %v870
        %1065 = vst [vmem:[%s371 + $0x68] sm:$0xff] %v873
        %1066 = vst [vmem:[%s371 + $0x70] sm:$0xff] %v878
        %1067 = vst [vmem:[%s371 + $0x78] sm:$0xff] %v881
        %v1068 = vpack.c.bf16 %v993, %v990
        %v1069 = vpack.c.bf16 %v1001, %v998
        %v1070 = vpack.c.bf16 %v1009, %v1006
        %v1071 = vpack.c.bf16 %v1017, %v1014
        %v1072 = vpack.c.bf16 %v1025, %v1022
        %v1073 = vpack.c.bf16 %v1033, %v1030
        %v1074 = vpack.c.bf16 %v1041, %v1038
        %v1075 = vpack.c.bf16 %v1049, %v1046
        %v1084 = vunpack.c.l.b16 %v1068
        %v1085 = vunpack.c.h.b16 %v1068
        %v1086 = vunpack.c.l.b16 %v1069
        %v1087 = vunpack.c.h.b16 %v1069
        %v1088 = vunpack.c.l.b16 %v1070
        %v1089 = vunpack.c.h.b16 %v1070
        %v1090 = vunpack.c.l.b16 %v1071
        %v1091 = vunpack.c.h.b16 %v1071
        %v1092 = vunpack.c.l.b16 %v1072
        %v1093 = vunpack.c.h.b16 %v1072
        %v1094 = vunpack.c.l.b16 %v1073
        %v1095 = vunpack.c.h.b16 %v1073
        %v1096 = vunpack.c.l.b16 %v1074
        %v1097 = vunpack.c.h.b16 %v1074
        %v1098 = vunpack.c.l.b16 %v1075
        %v1099 = vunpack.c.h.b16 %v1075
        %v1100 = vpack.c.b16 %v1084, %v1084
        %v1101 = vpack.c.b16 %v1085, %v1085
        %v1102 = vpack.c.b16 %v1086, %v1086
        %v1103 = vpack.c.b16 %v1087, %v1087
        %v1104 = vpack.c.b16 %v1088, %v1088
        %v1105 = vpack.c.b16 %v1089, %v1089
        %v1106 = vpack.c.b16 %v1090, %v1090
        %v1107 = vpack.c.b16 %v1091, %v1091
        %v1108 = vpack.c.b16 %v1092, %v1092
        %v1109 = vpack.c.b16 %v1093, %v1093
        %v1110 = vpack.c.b16 %v1094, %v1094
        %v1111 = vpack.c.b16 %v1095, %v1095
        %v1112 = vpack.c.b16 %v1096, %v1096
        %v1113 = vpack.c.b16 %v1097, %v1097
        %v1114 = vpack.c.b16 %v1098, %v1098
        %v1115 = vpack.c.b16 %v1099, %v1099
        %1132 = vst [vmem:[%s378] sm:$0xf] %v1100
        %1133 = vst [vmem:[%s378 + $0x4] sm:$0xf] %v1101
        %1134 = vst [vmem:[%s378 + $0x8] sm:$0xf] %v1102
        %1135 = vst [vmem:[%s378 + $0xc] sm:$0xf] %v1103
        %1136 = vst [vmem:[%s378 + $0x10] sm:$0xf] %v1104
        %1137 = vst [vmem:[%s378 + $0x14] sm:$0xf] %v1105
        %1138 = vst [vmem:[%s378 + $0x18] sm:$0xf] %v1106
        %1139 = vst [vmem:[%s378 + $0x1c] sm:$0xf] %v1107
        %1140 = vst [vmem:[%s378 + $0x20] sm:$0xf] %v1108
        %1141 = vst [vmem:[%s378 + $0x24] sm:$0xf] %v1109
        %1142 = vst [vmem:[%s378 + $0x28] sm:$0xf] %v1110
        %1143 = vst [vmem:[%s378 + $0x2c] sm:$0xf] %v1111
        %1144 = vst [vmem:[%s378 + $0x30] sm:$0xf] %v1112
        %1145 = vst [vmem:[%s378 + $0x34] sm:$0xf] %v1113
        %1146 = vst [vmem:[%s378 + $0x38] sm:$0xf] %v1114
        %1147 = vst [vmem:[%s378 + $0x3c] sm:$0xf] %v1115
        %s1148 = sand.u32 %s191, 1
        %s1149 = scalar_lea.sflag [#allocation4], %s1148
        %s1150 = sand.u32 %s191, 1
        %s1151 = smul.addr %s1150, 128
        %s1152 = scalar_lea.vmem [#allocation10], %s1151
        %s1153 = sand.u32 %s217, 1
        %s1154 = scalar_lea.sflag [#allocation12], %s1153
        %s1155 = sand.u32 %s217, 1
        %s1156 = smul.addr %s1155, 64
        %s1157 = scalar_lea.vmem [#allocation11], %s1156
        // Predicated region
        $region65: #{tpu_custom_call.1} parent=47 // pred_check
          %p1158 = pneg %p201
        $region66: #{tpu_custom_call.1} parent=47 // pred_check_branch
          %1160 = sbr.rel (%p1158) target = $region68
        $region67: #{tpu_custom_call.1} parent=47 // pred_region
          %s1161 = smul.u32 16, %s31
          %s1163 = ssub.s32 2048, 2048
          %1164 = vsyncadd %s1149, %s1163
          %s1165 = smul.addr %s1161, 128
          %s1166 = scalar_lea.hbm %s7, %s1165
          %s1167 = sshll.u32 %s1152, 4
          %s1168 = int_to_ptr.vmem [resolvable:$true] %s1167
          %1173 = dma.vmem_to_hbm [thread:$0]  %s1168, 2048, %s1166, %s1149, 128, 128, 8
        $region68: #{tpu_custom_call.1} parent=47 // pred_fallthru
          _
        // Predicated region
        $region69: #{tpu_custom_call.1} parent=47 // pred_check
          %p1174 = pneg %p227
        $region70: #{tpu_custom_call.1} parent=47 // pred_check_branch
          %1176 = sbr.rel (%p1174) target = $region72
        $region71: #{tpu_custom_call.1} parent=47 // pred_region
          %s1177 = smul.u32 16, %s31
          %s1179 = ssub.s32 1024, 1024
          %1180 = vsyncadd %s1154, %s1179
          %s1181 = smul.addr %s1177, 64
          %s1182 = scalar_lea.hbm %s8, %s1181
          %s1183 = sshll.u32 %s1157, 4
          %s1184 = int_to_ptr.vmem [resolvable:$true] %s1183
          %1189 = dma.vmem_to_hbm [thread:$0]  %s1184, 1024, %s1182, %s1154, 64, 64, 4
        $region72: #{tpu_custom_call.1} parent=47 // pred_fallthru
          _
      $region48: #{tpu_custom_call.1} parent=5 // pred_fallthru
        _
      %p1190 = scmp.le.s32.totalorder 2, %s26
      // Predicated region
      $region73: #{tpu_custom_call.1} parent=5 // pred_check
        %p1191 = pneg %p1190
      $region74: #{tpu_custom_call.1} parent=5 // pred_check_branch
        %1193 = sbr.rel (%p1191) target = $region76
      $region75: #{tpu_custom_call.1} parent=5 // pred_region
        %s1194 = ssub.s32 %s26, 2
        // Predicated region
        $region77: #{tpu_custom_call.1} parent=75 // pred_check
          %p1195 = pneg %p207
        $region78: #{tpu_custom_call.1} parent=75 // pred_check_branch
          %1197 = sbr.rel (%p1195) target = $region80
        $region79: #{tpu_custom_call.1} parent=75 // pred_region
          %s1198 = sand.u32 %s192, 1
          %s1199 = scalar_lea.sflag [#allocation4], %s1198
          %s1200 = sand.u32 %s192, 1
          %s1201 = smul.addr %s1200, 128
          %s1202 = scalar_lea.vmem [#allocation10], %s1201
          %1203 = dma.done %s1199, 2048
        $region80: #{tpu_custom_call.1} parent=75 // pred_fallthru
          _
        // Predicated region
        $region81: #{tpu_custom_call.1} parent=75 // pred_check
          %p1204 = pneg %p233
        $region82: #{tpu_custom_call.1} parent=75 // pred_check_branch
          %1206 = sbr.rel (%p1204) target = $region84
        $region83: #{tpu_custom_call.1} parent=75 // pred_region
          %s1207 = sand.u32 %s218, 1
          %s1208 = scalar_lea.sflag [#allocation12], %s1207
          %s1209 = sand.u32 %s218, 1
          %s1210 = smul.addr %s1209, 64
          %s1211 = scalar_lea.vmem [#allocation11], %s1210
          %1212 = dma.done %s1208, 1024
        $region84: #{tpu_custom_call.1} parent=75 // pred_fallthru
          _
      $region76: #{tpu_custom_call.1} parent=5 // pred_fallthru
        _
    $region6: #{tpu_custom_call.1} parent=1 // loop_footer
      %s30 = sadd.s32 1, %s26
    $region7: #{tpu_custom_call.1} parent=1 // loop_footer_branch
      %25 = sbr.rel target = $region3
    $region8: #{tpu_custom_call.1} parent=1 // loop_exit
      _
    %1213 = vsyncpa [#allocation3], 1
    %s1214 = scalar_lea.sflag [#allocation3], 1
    %1215 = vsyncpa %s1214, 1
    %1216 = vsyncpa [#allocation6], 1
    %1217 = vsyncpa [#allocation9], 1
    %1218 = vsyncpa [#allocation4], 1
    %s1219 = scalar_lea.sflag [#allocation4], 1
    %1220 = vsyncpa %s1219, 1
    %1221 = vsyncpa [#allocation12], 1
    %s1222 = scalar_lea.sflag [#allocation12], 1
    %1223 = vsyncpa %s1222, 1

</llo_original>
